<compile_context>
chip_gen: v5e
topology: v5e:2x2
jax: 0.10.0
libtpu: 0.0.40
codegen_flags: <defaults>
</compile_context>

<pallas_src>
import functools
import math

import jax
import jax.numpy as jnp
from jax.experimental import pallas as pl
from jax.experimental.pallas import tpu as pltpu


def _default_vmem_limit():
    # Generation-aware scoped-VMEM limit: ~75% of physical, floored at the value
    # known to work (48 MiB) and capped at 100 MiB (v5e/v6e have 128 MiB).
    try:
        cap = pltpu.get_tpu_info().vmem_capacity_bytes
        return max(48 * 1024 * 1024, min(int(cap) * 3 // 4, 100 * 1024 * 1024))
    except Exception:
        return 48 * 1024 * 1024


_VMEM_LIMIT = _default_vmem_limit()


def _round_up(v, m):
    return (v + m - 1) // m * m


def _pad2(x, rows, cols):
    if x.shape == (rows, cols):
        return x
    return jnp.pad(x, ((0, rows - x.shape[0]), (0, cols - x.shape[1])))


# --------------------------------------------------------------------------- #
# Pallas kernels
# --------------------------------------------------------------------------- #
def _mm_kernel(x_ref, w_ref, b_ref, o_ref, acc_ref, *, relu):
    # Tiled matmul: bf16 operands on the MXU, f32 accumulator resident over K.
    k = pl.program_id(2)

    @pl.when(k == 0)
    def _():
        acc_ref[...] = jnp.zeros_like(acc_ref)

    acc_ref[...] += jnp.dot(x_ref[...], w_ref[...],
                            preferred_element_type=jnp.float32)

    @pl.when(k == pl.num_programs(2) - 1)
    def _():
        out = acc_ref[...] + b_ref[...]
        if relu:
            out = jnp.maximum(out, 0.0)
        o_ref[...] = out.astype(o_ref.dtype)


def _mm_res_kernel(x_ref, w_ref, b_ref, r_ref, o_ref, acc_ref, *, relu):
    # Same as _mm_kernel but fuses the residual add on the final K step.
    k = pl.program_id(2)

    @pl.when(k == 0)
    def _():
        acc_ref[...] = jnp.zeros_like(acc_ref)

    acc_ref[...] += jnp.dot(x_ref[...], w_ref[...],
                            preferred_element_type=jnp.float32)

    @pl.when(k == pl.num_programs(2) - 1)
    def _():
        out = acc_ref[...] + b_ref[...] + r_ref[...].astype(jnp.float32)
        if relu:
            out = jnp.maximum(out, 0.0)
        o_ref[...] = out.astype(o_ref.dtype)


def _direct3x3_kernel(x_ref, w_ref, b_ref, o_ref, acc_ref, *, wp, mspan, relu):
    # Direct 3x3 stride-1 conv for one image.
    #   x_ref: (1, Hp*Wp, C)  padded image, rows flattened row-major
    #   w_ref: (9, C, Cout)   tap-major weights
    #   o_ref: (1, Mspan, Cout) where Mspan = (H-1)*Wp + W; row h*Wp+w is output
    #          pixel (h, w) (rows with w >= W are wrap-around garbage, discarded
    #          by the wrapper).  Each tap contributes a contiguous row-shifted
    #          slab matmul -- no im2col buffer in HBM.
    acc_ref[...] = jnp.zeros_like(acc_ref)
    for kh in range(3):
        for kw in range(3):
            t = kh * 3 + kw
            lhs = x_ref[0, pl.ds(kh * wp + kw, mspan), :]
            acc_ref[...] += jnp.dot(lhs, w_ref[t],
                                    preferred_element_type=jnp.float32)
    out = acc_ref[...] + b_ref[...]
    if relu:
        out = jnp.maximum(out, 0.0)
    o_ref[0] = out.astype(o_ref.dtype)


def _maxpool_kernel(p_ref, o_ref):
    # p_ref: (K*K, tm, L) window slabs -> elementwise max over the window axis.
    o_ref[...] = jnp.max(p_ref[...], axis=0)


def _avgpool_fc_kernel(x_ref, w_ref, b_ref, o_ref):
    # x_ref: (1, HW, C) bf16 -> f32 global average pool -> (1, C) @ (C, ncls_pad).
    pooled = jnp.mean(x_ref[0].astype(jnp.float32), axis=0, keepdims=True)
    o_ref[...] = (
        jnp.dot(pooled.astype(w_ref.dtype), w_ref[...],
                preferred_element_type=jnp.float32)
        + b_ref[...]
    )


# --------------------------------------------------------------------------- #
# pallas_call builders (cached per shape/config)
# --------------------------------------------------------------------------- #
@functools.lru_cache(maxsize=None)
def _get_matmul_call(Mp, Kp, Np, tm, tk, tn, relu, has_res):
    kern = functools.partial(_mm_res_kernel if has_res else _mm_kernel, relu=relu)
    in_specs = [
        pl.BlockSpec((tm, tk), lambda i, j, k: (i, k)),
        pl.BlockSpec((tk, tn), lambda i, j, k: (k, j)),
        pl.BlockSpec((1, tn), lambda i, j, k: (0, j)),
    ]
    if has_res:
        in_specs.append(pl.BlockSpec((tm, tn), lambda i, j, k: (i, j)))
    return pl.pallas_call(
        kern,
        grid=(Mp // tm, Np // tn, Kp // tk),
        in_specs=in_specs,
        out_specs=pl.BlockSpec((tm, tn), lambda i, j, k: (i, j)),
        out_shape=jax.ShapeDtypeStruct((Mp, Np), jnp.bfloat16),
        scratch_shapes=[pltpu.VMEM((tm, tn), jnp.float32)],
        compiler_params=pltpu.CompilerParams(
            dimension_semantics=("parallel", "parallel", "arbitrary"),
            vmem_limit_bytes=_VMEM_LIMIT,
        ),
    )


@functools.lru_cache(maxsize=None)
def _get_direct3x3_call(n, hw, c, cout, wp, mspan, relu):
    kern = functools.partial(_direct3x3_kernel, wp=wp, mspan=mspan, relu=relu)
    return pl.pallas_call(
        kern,
        grid=(n,),
        in_specs=[
            pl.BlockSpec((1, hw, c), lambda i: (i, 0, 0)),
            pl.BlockSpec((9, c, cout), lambda i: (0, 0, 0)),
            pl.BlockSpec((1, cout), lambda i: (0, 0)),
        ],
        out_specs=pl.BlockSpec((1, mspan, cout), lambda i: (i, 0, 0)),
        out_shape=jax.ShapeDtypeStruct((n, mspan, cout), jnp.bfloat16),
        scratch_shapes=[pltpu.VMEM((mspan, cout), jnp.float32)],
        compiler_params=pltpu.CompilerParams(
            dimension_semantics=("parallel",),
            vmem_limit_bytes=_VMEM_LIMIT,
        ),
    )


@functools.lru_cache(maxsize=None)
def _get_maxpool_call(kk, rows, lanes, tm):
    return pl.pallas_call(
        _maxpool_kernel,
        grid=(rows // tm,),
        in_specs=[pl.BlockSpec((kk, tm, lanes), lambda i: (0, i, 0))],
        out_specs=pl.BlockSpec((tm, lanes), lambda i: (i, 0)),
        out_shape=jax.ShapeDtypeStruct((rows, lanes), jnp.bfloat16),
        compiler_params=pltpu.CompilerParams(
            dimension_semantics=("parallel",),
            vmem_limit_bytes=_VMEM_LIMIT,
        ),
    )


@functools.lru_cache(maxsize=None)
def _get_avgfc_call(n, hw, c, np_):
    return pl.pallas_call(
        _avgpool_fc_kernel,
        grid=(n,),
        in_specs=[
            pl.BlockSpec((1, hw, c), lambda i: (i, 0, 0)),
            pl.BlockSpec((c, np_), lambda i: (0, 0)),
            pl.BlockSpec((1, np_), lambda i: (0, 0)),
        ],
        out_specs=pl.BlockSpec((1, np_), lambda i: (i, 0)),
        out_shape=jax.ShapeDtypeStruct((n, np_), jnp.float32),
        compiler_params=pltpu.CompilerParams(
            dimension_semantics=("parallel",),
            vmem_limit_bytes=_VMEM_LIMIT,
        ),
    )


# --------------------------------------------------------------------------- #
# Host-side glue: tiling decisions, im2col, padding (all jitted per shape)
# --------------------------------------------------------------------------- #
_TK_CANDIDATES = (2048, 1792, 1536, 1280, 1152, 1024, 896, 768, 640, 512, 384,
                  256, 128)


def fused_matmul(x, w, bias, relu=False, residual=None):
    """x: (M, K), w: (K, N) [BN scale pre-folded], bias: (N,), residual: (M, N)."""
    M, K = x.shape
    N = w.shape[1]

    # Tile selection: MXU-friendly tiles; collapse the K reduction to one step
    # whenever Kp <= 2048 (all ResNet-152 1x1/7x7 convs), bf16 sublane = 16.
    if M >= 512:
        tm = 512
    elif M >= 256:
        tm = 256
    else:
        tm = _round_up(M, 16)
    Mp = _round_up(M, tm)
    Kp = _round_up(K, 128)
    if Kp <= 2048:
        tk = Kp
    else:
        tk = next(c for c in _TK_CANDIDATES if Kp % c == 0)
    Np = _round_up(N, 128)
    tn = 256 if Np % 256 == 0 else 128
    # v7x megacore: make sure the parallel (i, j) grid has >= 2 blocks when we can.
    if (Mp // tm) * (Np // tn) < 2 and tn == 256:
        tn = 128

    if x.dtype != jnp.bfloat16:
        x = x.astype(jnp.bfloat16)
    if w.dtype != jnp.bfloat16:
        w = w.astype(jnp.bfloat16)
    x = _pad2(x, Mp, Kp)
    w = _pad2(w, Kp, Np)
    b = bias.astype(jnp.float32)
    if N != Np:
        b = jnp.pad(b, (0, Np - N))
    args = [x, w, b.reshape(1, Np)]
    if residual is not None:
        r = residual
        if r.dtype != jnp.bfloat16:
            r = r.astype(jnp.bfloat16)
        args.append(_pad2(r, Mp, Np))

    out = _get_matmul_call(Mp, Kp, Np, tm, tk, tn, bool(relu),
                           residual is not None)(*args)
    if (Mp, Np) != (M, N):
        out = out[:M, :N]
    return out


def _conv_im2col(x, w, bias, residual, *, stride, padding, relu):
    """x: NHWC bf16, w: (KH, KW, Cin, Cout) with BN scale folded in, bias: f32."""
    n, h, wd, c = x.shape
    kh, kw, cin, cout = w.shape
    oh = (h + 2 * padding - kh) // stride + 1
    ow = (wd + 2 * padding - kw) // stride + 1
    if kh == 1 and kw == 1 and padding == 0:
        # TODO(synk): the strided gather for stride-2 downsamples is still a copy
        # feeding the pallas input; under jit it fuses with the pad into one
        # producer fusion, but a strided index_map would avoid it entirely.
        cols = x[:, ::stride, ::stride, :].reshape(-1, c)
    else:
        # Only conv1 (7x7) and the three stride-2 3x3 convs still take this path;
        # under jit the concat+pad fuse into a single producer of the cols buffer.
        xp = jnp.pad(x, ((0, 0), (padding, padding), (padding, padding), (0, 0)))
        patches = [
            xp[:, i:i + stride * oh:stride, j:j + stride * ow:stride, :]
            for i in range(kh) for j in range(kw)
        ]
        cols = jnp.concatenate(patches, axis=-1).reshape(-1, kh * kw * c)
    wmat = w.reshape(kh * kw * cin, cout)
    res = residual.reshape(-1, cout) if residual is not None else None
    out = fused_matmul(cols, wmat, bias, relu=relu, residual=res)
    return out.reshape(n, oh, ow, cout)


def _conv3x3_direct(x, w, bias, *, relu):
    """Direct 3x3 / stride-1 / pad-1 conv: no im2col buffer in HBM."""
    n, h, wd, c = x.shape
    cout = w.shape[3]
    hp, wp = h + 2, wd + 2
    hw = hp * wp
    mspan = (h - 1) * wp + wd
    if x.dtype != jnp.bfloat16:
        x = x.astype(jnp.bfloat16)
    xp = jnp.pad(x, ((0, 0), (1, 1), (1, 1), (0, 0)))
    xf = xp.reshape(n, hw, c)
    wt = w.reshape(9, c, cout).astype(jnp.bfloat16)
    bp = bias.astype(jnp.float32).reshape(1, cout)
    out_span = _get_direct3x3_call(n, hw, c, cout, wp, mspan, bool(relu))(xf, wt, bp)
    # Extract the true output pixels (row h*wp + w) and drop wrap-around rows.
    full = jnp.pad(out_span, ((0, 0), (0, h * wp - mspan), (0, 0)))
    return full.reshape(n, h, wp, cout)[:, :, :wd, :]


def _maxpool_impl(x):
    n, h, w, c = x.shape
    k, s, pad = 3, 2, 1
    oh = (h + 2 * pad - k) // s + 1
    ow = (w + 2 * pad - k) // s + 1
    xp = jnp.pad(
        x, ((0, 0), (pad, pad), (pad, pad), (0, 0)), constant_values=-jnp.inf
    )
    pats = [
        xp[:, i:i + s * oh:s, j:j + s * ow:s, :] for i in range(k) for j in range(k)
    ]
    if (ow * c) % 128 == 0:
        # Lane-dense layout: fold width into the lane dim so stores are unmasked.
        rows, lanes = n * oh, ow * c
        p = jnp.stack([pt.reshape(rows, lanes) for pt in pats], axis=0)
        cap = max(8, (2 * 1024 * 1024) // (k * k * lanes * 2) // 8 * 8)
        tm = min(_round_up(rows, 8), cap)
        rp = _round_up(rows, tm)
        if rp != rows:
            p = jnp.pad(p, ((0, 0), (0, rp - rows), (0, 0)))
        out = _get_maxpool_call(k * k, rp, lanes, tm)(p)
        return out[:rows].reshape(n, oh, ow, c)
    # Fallback layout (lane dim = C).
    M = n * oh * ow
    p = jnp.stack(pats, axis=0).reshape(k * k, M, c)
    tm = 512 if M >= 512 else _round_up(M, 16)
    Mp = _round_up(M, tm)
    if Mp != M:
        p = jnp.pad(p, ((0, 0), (0, Mp - M), (0, 0)))
    out = _get_maxpool_call(k * k, Mp, c, tm)(p)
    return out[:M].reshape(n, oh, ow, c)


def _avgfc_impl(x, w, b):
    n, h, wd, c = x.shape
    ncls = w.shape[1]
    npad = _round_up(ncls, 128)
    xr = x.reshape(n, h * wd, c)
    wp_ = _pad2(w.astype(jnp.bfloat16), c, npad)
    bp = jnp.pad(b.astype(jnp.float32), (0, npad - ncls)).reshape(1, npad)
    out = _get_avgfc_call(n, h * wd, c, npad)(xr, wp_, bp)
    return out[:, :ncls]


# Per-op jit: every distinct (shape, config) compiles once and all pad/im2col/
# slice glue fuses with the pallas_call producers instead of running eagerly.
_conv_im2col_jit = jax.jit(_conv_im2col,
                           static_argnames=("stride", "padding", "relu"))
_conv3x3_direct_jit = jax.jit(_conv3x3_direct, static_argnames=("relu",))
maxpool_3x3_s2 = jax.jit(_maxpool_impl)
avgpool_fc = jax.jit(_avgfc_impl)


_DIRECT3X3_OK = None


def _direct3x3_ok():
    # One tiny probe compile; if the direct-conv kernel fails to lower on this
    # backend we silently fall back to the (slower but proven) im2col path.
    global _DIRECT3X3_OK
    if _DIRECT3X3_OK is None:
        try:
            xs = jnp.ones((1, 2, 2, 64), jnp.bfloat16)
            ws = jnp.full((3, 3, 64, 64), 0.01, jnp.bfloat16)
            bs = jnp.zeros((64,), jnp.float32)
            jax.block_until_ready(_conv3x3_direct_jit(xs, ws, bs, relu=True))
            _DIRECT3X3_OK = True
        except Exception:
            _DIRECT3X3_OK = False
    return _DIRECT3X3_OK


def conv2d_bn(x, w, bias, stride=1, padding=0, relu=False, residual=None):
    kh, kw = int(w.shape[0]), int(w.shape[1])
    if (kh == 3 and kw == 3 and stride == 1 and padding == 1
            and residual is None and _direct3x3_ok()):
        return _conv3x3_direct_jit(x, w, bias, relu=relu)
    return _conv_im2col_jit(x, w, bias, residual,
                            stride=stride, padding=padding, relu=relu)


# --------------------------------------------------------------------------- #
# ResNet-152 parameters (deterministic synthetic init, BN scale folded into W)
# --------------------------------------------------------------------------- #
_LAYER_CFG = [(64, 3, 1), (128, 8, 2), (256, 36, 2), (512, 3, 2)]
_EXPANSION = 4
_BN_EPS = 1e-5


def _he_normal(key, shape, fan_in):
    return jax.random.normal(key, shape, jnp.float32) * math.sqrt(2.0 / fan_in)


def _bn_fold(c):
    gamma = jnp.ones((c,), jnp.float32)
    beta = jnp.zeros((c,), jnp.float32)
    mean = jnp.zeros((c,), jnp.float32)
    var = jnp.ones((c,), jnp.float32)
    scale = gamma / jnp.sqrt(var + _BN_EPS)
    bias = beta - mean * scale
    return scale, bias


def _conv_bn(key, shape, fan_in):
    w = _he_normal(key, shape, fan_in)
    scale, bias = _bn_fold(shape[-1])
    # Fold the BN scale into the weights (per output channel) -> epilogue is +bias.
    return {"w": (w * scale).astype(jnp.bfloat16), "b": bias}


def init_resnet152_params(key, nclasses):
    keys = iter(jax.random.split(key, 512))
    params = {"conv1": _conv_bn(next(keys), (7, 7, 3, 64), 7 * 7 * 3)}

    cin = 64
    for li, (width, nblocks, stride) in enumerate(_LAYER_CFG, start=1):
        blocks = []
        for bi in range(nblocks):
            s = stride if bi == 0 else 1
            cout = width * _EXPANSION
            blk = {"stride": s}
            blk["c1"] = _conv_bn(next(keys), (1, 1, cin, width), cin)
            blk["c2"] = _conv_bn(next(keys), (3, 3, width, width), 9 * width)
            blk["c3"] = _conv_bn(next(keys), (1, 1, width, cout), width)
            if bi == 0:
                blk["ds"] = _conv_bn(next(keys), (1, 1, cin, cout), cin)
            blocks.append(blk)
            cin = cout
        params[f"layer{li}"] = blocks

    params["fc"] = {
        "w": _he_normal(next(keys), (512 * _EXPANSION, nclasses), 512 * _EXPANSION),
        "b": jnp.zeros((nclasses,), jnp.float32),
    }
    return params


# --------------------------------------------------------------------------- #
# Forward pass
# --------------------------------------------------------------------------- #
def _bottleneck(x, blk):
    identity = x
    out = conv2d_bn(x, blk["c1"]["w"], blk["c1"]["b"],
                    stride=1, padding=0, relu=True)
    out = conv2d_bn(out, blk["c2"]["w"], blk["c2"]["b"],
                    stride=blk["stride"], padding=1, relu=True)
    if "ds" in blk:
        identity = conv2d_bn(x, blk["ds"]["w"], blk["ds"]["b"],
                             stride=blk["stride"], padding=0, relu=False)
    # conv3 + bn3 + residual add + relu, fused into one tiled Pallas matmul kernel.
    out = conv2d_bn(out, blk["c3"]["w"], blk["c3"]["b"],
                    stride=1, padding=0, relu=True, residual=identity)
    return out


def hostelnet0_forward(params, x_nchw):
    x = jnp.transpose(x_nchw, (0, 2, 3, 1)).astype(jnp.bfloat16)  # NCHW -> NHWC
    p = params
    x = conv2d_bn(x, p["conv1"]["w"], p["conv1"]["b"],
                  stride=2, padding=3, relu=True)
    x = maxpool_3x3_s2(x)
    for li in range(1, 5):
        for blk in p[f"layer{li}"]:
            x = _bottleneck(x, blk)
    return avgpool_fc(x, p["fc"]["w"], p["fc"]["b"])


# --------------------------------------------------------------------------- #
if __name__ == "__main__":
    nclasses = 10
    key = jax.random.PRNGKey(0)
    pkey, xkey = jax.random.split(key)
    params = init_resnet152_params(pkey, nclasses)
    x = jax.random.normal(xkey, (2, 3, 16, 16), jnp.float32)  # NCHW, 3 channels
    out = hostelnet0_forward(params, x)
    out = jax.block_until_ready(out)
    assert out.shape == (2, nclasses), out.shape
    assert bool(jnp.all(jnp.isfinite(out)))
    print("KERNEL_OK")
</pallas_src>

<mosaic_0001>
module attributes {stable_mosaic.version = 11 : i64} {
  func.func @_mm_kernel(%arg0: i32, %arg1: i32, %arg2: i32, %arg3: memref<128x256xbf16, #tpu.memory_space<vmem>>, %arg4: memref<256x128xbf16, #tpu.memory_space<vmem>>, %arg5: memref<1x128xf32, #tpu.memory_space<vmem>>, %arg6: memref<128x128xbf16, #tpu.memory_space<vmem>>, %arg7: memref<128x128xf32, #tpu.memory_space<vmem>>) attributes {dimension_semantics = [#tpu.dimension_semantics<parallel>, #tpu.dimension_semantics<parallel>, #tpu.dimension_semantics<arbitrary>], iteration_bounds = array<i64: 1, 1, 1>, scalar_prefetch = 0 : i64, scratch_operands = 1 : i64, tpu.core_type = #tpu.core_type<tc>, window_params = [{transform_indices = @transform_0, window_bounds = array<i64: 128, 256>}, {transform_indices = @transform_1, window_bounds = array<i64: 256, 128>}, {transform_indices = @transform_2, window_bounds = array<i64: 1, 128>}, {transform_indices = @transform_3, window_bounds = array<i64: 128, 128>}]} {
    %c0_i32 = arith.constant 0 : i32
    %0 = arith.cmpi eq, %arg2, %c0_i32 : i32
    %1 = arith.extui %0 : i1 to i32
    %c0_i32_0 = arith.constant 0 : i32
    %2 = arith.cmpi ne, %1, %c0_i32_0 : i32
    scf.if %2 {
      %cst_10 = arith.constant 0.000000e+00 : f32
      %12 = vector.broadcast %cst_10 : f32 to vector<128x128xf32>
      %c0_11 = arith.constant 0 : index
      %c0_12 = arith.constant 0 : index
      %13 = vector.load %arg7[%c0_11, %c0_12] : memref<128x128xf32, #tpu.memory_space<vmem>>, vector<128x128xf32>
      tpu.vector_store %arg7[%c0_11, %c0_12], %12 {strides = array<i32>} : memref<128x128xf32, #tpu.memory_space<vmem>>, vector<128x128xf32>,
    } else {
    }
    %c0 = arith.constant 0 : index
    %c0_1 = arith.constant 0 : index
    %3 = vector.load %arg7[%c0, %c0_1] : memref<128x128xf32, #tpu.memory_space<vmem>>, vector<128x128xf32>
    %c0_2 = arith.constant 0 : index
    %c0_3 = arith.constant 0 : index
    %4 = vector.load %arg3[%c0_2, %c0_3] : memref<128x256xbf16, #tpu.memory_space<vmem>>, vector<128x256xbf16>
    %c0_4 = arith.constant 0 : index
    %c0_5 = arith.constant 0 : index
    %5 = vector.load %arg4[%c0_4, %c0_5] : memref<256x128xbf16, #tpu.memory_space<vmem>>, vector<256x128xbf16>
    %cst = arith.constant dense<0.000000e+00> : vector<128x128xf32>
    %6 = tpu.matmul %4, %5, %cst {dimension_numbers = #tpu.dot_dimension_numbers<[1], [0], [0], [1], [0, 0, 1, 1], [], []>} : vector<128x256xbf16>, vector<256x128xbf16>, vector<128x128xf32> -> vector<128x128xf32>
    %7 = arith.addf %3, %6 : vector<128x128xf32>
    %c0_6 = arith.constant 0 : index
    %c0_7 = arith.constant 0 : index
    %8 = vector.load %arg7[%c0_6, %c0_7] : memref<128x128xf32, #tpu.memory_space<vmem>>, vector<128x128xf32>
    tpu.vector_store %arg7[%c0_6, %c0_7], %7 {strides = array<i32>} : memref<128x128xf32, #tpu.memory_space<vmem>>, vector<128x128xf32>,
    %c0_i32_8 = arith.constant 0 : i32
    %9 = arith.cmpi eq, %arg2, %c0_i32_8 : i32
    %10 = arith.extui %9 : i1 to i32
    %c0_i32_9 = arith.constant 0 : i32
    %11 = arith.cmpi ne, %10, %c0_i32_9 : i32
    scf.if %11 {
      %c0_10 = arith.constant 0 : index
      %c0_11 = arith.constant 0 : index
      %12 = vector.load %arg7[%c0_10, %c0_11] : memref<128x128xf32, #tpu.memory_space<vmem>>, vector<128x128xf32>
      %c0_12 = arith.constant 0 : index
      %c0_13 = arith.constant 0 : index
      %13 = vector.load %arg5[%c0_12, %c0_13] : memref<1x128xf32, #tpu.memory_space<vmem>>, vector<1x128xf32>
      %14 = vector.broadcast %13 : vector<1x128xf32> to vector<128x128xf32>
      %15 = arith.addf %12, %14 : vector<128x128xf32>
      %cst_14 = arith.constant 0.000000e+00 : f32
      %16 = vector.broadcast %cst_14 : f32 to vector<128x128xf32>
      %17 = arith.maximumf %15, %16 : vector<128x128xf32>
      %18 = arith.truncf %17 : vector<128x128xf32> to vector<128x128xbf16>
      %c0_15 = arith.constant 0 : index
      %c0_16 = arith.constant 0 : index
      %19 = vector.load %arg6[%c0_15, %c0_16] : memref<128x128xbf16, #tpu.memory_space<vmem>>, vector<128x128xbf16>
      tpu.vector_store %arg6[%c0_15, %c0_16], %18 {strides = array<i32>} : memref<128x128xbf16, #tpu.memory_space<vmem>>, vector<128x128xbf16>,
    } else {
    }
    return
  }
  func.func @transform_0(%arg0: i32, %arg1: i32, %arg2: i32) -> (i32, i32) {
    %c0_i32 = arith.constant 0 : i32
    return %arg0, %arg2 : i32, i32
  }
  func.func @transform_1(%arg0: i32, %arg1: i32, %arg2: i32) -> (i32, i32) {
    %c0_i32 = arith.constant 0 : i32
    return %arg2, %arg1 : i32, i32
  }
  func.func @transform_2(%arg0: i32, %arg1: i32, %arg2: i32) -> (i32, i32) {
    %c0_i32 = arith.constant 0 : i32
    %c0_i32_0 = arith.constant 0 : i32
    return %c0_i32, %arg1 : i32, i32
  }
  func.func @transform_3(%arg0: i32, %arg1: i32, %arg2: i32) -> (i32, i32) {
    %c0_i32 = arith.constant 0 : i32
    return %arg0, %arg1 : i32, i32
  }
}

</mosaic_0001>

<llo_original>
// kernel: _conv_im2col.1
$region0: #{_conv_im2col.1}
  #allocation0 [shape = 'u32[]', space=smem, size = 0x4, offset = 0x4, fixed_abs, tag = 'smem constant byte address 0x4 - core index']
  #allocation1 [shape = 'u32[72,128]{1,0:T(1,128)}', space=vmem, size = 0x9000, scoped, tag = 'internal scratch']
  #allocation2 [shape = 'f32[128,128]{1,0:T(8,128)}', space=vmem, size = 0x10000, scoped, tag = 'scratch operand']
  %s0 = inlined_call_operand.vmem [shape: bf16[128,256], index: 0, kind: input, shape index: {}]
  %s1 = inlined_call_operand.vmem [shape: bf16[256,128], index: 1, kind: input, shape index: {}]
  %s2 = inlined_call_operand.vmem [shape: f32[1,128], index: 2, kind: input, shape index: {}]
  %s3 = inlined_call_operand.hbm [shape: bf16[128,128], index: 3, kind: output, shape index: {}]
  %s4 = sld [smem:[#allocation0]]
  $region30: #{_conv_im2col.1} parent=0
    _
  %s6 = ssub.s32 1, %s4
  %s7 = scalar_select 0, %s6, %s4
  $region1: #{_conv_im2col.1} parent=0
    #allocation3 [shape = 'u8[32768]{0}', space=vmem, size = 0x8000, scoped, tag = 'output window, operand 0, single buffered']
    #allocation4 [shape = 's32[1]{0}', space=sflag, size = 0x4, scoped, tag = 'scoped memory for _conv_im2col.1']
    %8 = vsyncpa [#allocation4], 0
    // Predicated region
    $region2: #{_conv_im2col.1} parent=1 // pred_check
      _
    $region3: #{_conv_im2col.1} parent=1 // pred_check_branch
      %10 = sbr.rel (0) target = $region5
    $region4: #{_conv_im2col.1} parent=1 // pred_region
      _
    $region5: #{_conv_im2col.1} parent=1 // pred_fallthru
      _
    // Predicated region
    $region6: #{_conv_im2col.1} parent=1 // pred_check
      _
    $region7: #{_conv_im2col.1} parent=1 // pred_check_branch
      %12 = sbr.rel (0) target = $region9
    $region8: #{_conv_im2col.1} parent=1 // pred_region
      _
    $region9: #{_conv_im2col.1} parent=1 // pred_fallthru
      _
    // Predicated region
    $region10: #{_conv_im2col.1} parent=1 // pred_check
      _
    $region11: #{_conv_im2col.1} parent=1 // pred_check_branch
      %14 = sbr.rel (0) target = $region13
    $region12: #{_conv_im2col.1} parent=1 // pred_region
      _
    $region13: #{_conv_im2col.1} parent=1 // pred_fallthru
      _
    %p15 = scmp.eq.s32.totalorder 0, 0
    // Predicated region
    $region14: #{_conv_im2col.1} parent=1 // pred_check
      %p16 = pneg %p15
    $region15: #{_conv_im2col.1} parent=1 // pred_check_branch
      %18 = sbr.rel (%p16) target = $region17
    $region16: #{_conv_im2col.1} parent=1 // pred_region
      %19 = vst [vmem:[#allocation2] sm:$0xff] 0.0
      %20 = vst [vmem:[#allocation2 + $0x8] sm:$0xff] 0.0
      %21 = vst [vmem:[#allocation2 + $0x10] sm:$0xff] 0.0
      %22 = vst [vmem:[#allocation2 + $0x18] sm:$0xff] 0.0
      %23 = vst [vmem:[#allocation2 + $0x20] sm:$0xff] 0.0
      %24 = vst [vmem:[#allocation2 + $0x28] sm:$0xff] 0.0
      %25 = vst [vmem:[#allocation2 + $0x30] sm:$0xff] 0.0
      %26 = vst [vmem:[#allocation2 + $0x38] sm:$0xff] 0.0
      %27 = vst [vmem:[#allocation2 + $0x40] sm:$0xff] 0.0
      %28 = vst [vmem:[#allocation2 + $0x48] sm:$0xff] 0.0
      %29 = vst [vmem:[#allocation2 + $0x50] sm:$0xff] 0.0
      %30 = vst [vmem:[#allocation2 + $0x58] sm:$0xff] 0.0
      %31 = vst [vmem:[#allocation2 + $0x60] sm:$0xff] 0.0
      %32 = vst [vmem:[#allocation2 + $0x68] sm:$0xff] 0.0
      %33 = vst [vmem:[#allocation2 + $0x70] sm:$0xff] 0.0
      %34 = vst [vmem:[#allocation2 + $0x78] sm:$0xff] 0.0
    $region17: #{_conv_im2col.1} parent=1 // pred_fallthru
      _
    %v35 = vld [vmem:[#allocation2] sm:$0xff]
    %v36 = vld [vmem:[#allocation2 + $0x8] sm:$0xff]
    %v37 = vld [vmem:[#allocation2 + $0x10] sm:$0xff]
    %v38 = vld [vmem:[#allocation2 + $0x18] sm:$0xff]
    %v39 = vld [vmem:[#allocation2 + $0x20] sm:$0xff]
    %v40 = vld [vmem:[#allocation2 + $0x28] sm:$0xff]
    %v41 = vld [vmem:[#allocation2 + $0x30] sm:$0xff]
    %v42 = vld [vmem:[#allocation2 + $0x38] sm:$0xff]
    %v43 = vld [vmem:[#allocation2 + $0x40] sm:$0xff]
    %v44 = vld [vmem:[#allocation2 + $0x48] sm:$0xff]
    %v45 = vld [vmem:[#allocation2 + $0x50] sm:$0xff]
    %v46 = vld [vmem:[#allocation2 + $0x58] sm:$0xff]
    %v47 = vld [vmem:[#allocation2 + $0x60] sm:$0xff]
    %v48 = vld [vmem:[#allocation2 + $0x68] sm:$0xff]
    %v49 = vld [vmem:[#allocation2 + $0x70] sm:$0xff]
    %v50 = vld [vmem:[#allocation2 + $0x78] sm:$0xff]
    %v51 = vld [vmem:[%s0] sm:$0xff]
    %v52 = vld [vmem:[%s0 + $0x8] sm:$0xff]
    %v53 = vld [vmem:[%s0 + $0x10] sm:$0xff]
    %v54 = vld [vmem:[%s0 + $0x18] sm:$0xff]
    %v55 = vld [vmem:[%s0 + $0x20] sm:$0xff]
    %v56 = vld [vmem:[%s0 + $0x28] sm:$0xff]
    %v57 = vld [vmem:[%s0 + $0x30] sm:$0xff]
    %v58 = vld [vmem:[%s0 + $0x38] sm:$0xff]
    %v59 = vld [vmem:[%s0 + $0x40] sm:$0xff]
    %v60 = vld [vmem:[%s0 + $0x48] sm:$0xff]
    %v61 = vld [vmem:[%s0 + $0x50] sm:$0xff]
    %v62 = vld [vmem:[%s0 + $0x58] sm:$0xff]
    %v63 = vld [vmem:[%s0 + $0x60] sm:$0xff]
    %v64 = vld [vmem:[%s0 + $0x68] sm:$0xff]
    %v65 = vld [vmem:[%s0 + $0x70] sm:$0xff]
    %v66 = vld [vmem:[%s0 + $0x78] sm:$0xff]
    %v67 = vld [vmem:[%s1] sm:$0xf]
    %v68 = vld [vmem:[%s1 + $0x4] sm:$0xf]
    %v69 = vld [vmem:[%s1 + $0x8] sm:$0xf]
    %v70 = vld [vmem:[%s1 + $0xc] sm:$0xf]
    %v71 = vld [vmem:[%s1 + $0x10] sm:$0xf]
    %v72 = vld [vmem:[%s1 + $0x14] sm:$0xf]
    %v73 = vld [vmem:[%s1 + $0x18] sm:$0xf]
    %v74 = vld [vmem:[%s1 + $0x1c] sm:$0xf]
    %v75 = vld [vmem:[%s1 + $0x20] sm:$0xf]
    %v76 = vld [vmem:[%s1 + $0x24] sm:$0xf]
    %v77 = vld [vmem:[%s1 + $0x28] sm:$0xf]
    %v78 = vld [vmem:[%s1 + $0x2c] sm:$0xf]
    %v79 = vld [vmem:[%s1 + $0x30] sm:$0xf]
    %v80 = vld [vmem:[%s1 + $0x34] sm:$0xf]
    %v81 = vld [vmem:[%s1 + $0x38] sm:$0xf]
    %v82 = vld [vmem:[%s1 + $0x3c] sm:$0xf]
    %v83 = vld [vmem:[%s1 + $0x40] sm:$0xf]
    %v84 = vld [vmem:[%s1 + $0x44] sm:$0xf]
    %v85 = vld [vmem:[%s1 + $0x48] sm:$0xf]
    %v86 = vld [vmem:[%s1 + $0x4c] sm:$0xf]
    %v87 = vld [vmem:[%s1 + $0x50] sm:$0xf]
    %v88 = vld [vmem:[%s1 + $0x54] sm:$0xf]
    %v89 = vld [vmem:[%s1 + $0x58] sm:$0xf]
    %v90 = vld [vmem:[%s1 + $0x5c] sm:$0xf]
    %v91 = vld [vmem:[%s1 + $0x60] sm:$0xf]
    %v92 = vld [vmem:[%s1 + $0x64] sm:$0xf]
    %v93 = vld [vmem:[%s1 + $0x68] sm:$0xf]
    %v94 = vld [vmem:[%s1 + $0x6c] sm:$0xf]
    %v95 = vld [vmem:[%s1 + $0x70] sm:$0xf]
    %v96 = vld [vmem:[%s1 + $0x74] sm:$0xf]
    %v97 = vld [vmem:[%s1 + $0x78] sm:$0xf]
    %v98 = vld [vmem:[%s1 + $0x7c] sm:$0xf]
    %v115 = vunpack.c.l.b16 %v51
    %v116 = vunpack.c.h.b16 %v51
    %v117 = vunpack.c.l.b16 %v52
    %v118 = vunpack.c.h.b16 %v52
    %v119 = vunpack.c.l.b16 %v53
    %v120 = vunpack.c.h.b16 %v53
    %v121 = vunpack.c.l.b16 %v54
    %v122 = vunpack.c.h.b16 %v54
    %v123 = vunpack.c.l.b16 %v55
    %v124 = vunpack.c.h.b16 %v55
    %v125 = vunpack.c.l.b16 %v56
    %v126 = vunpack.c.h.b16 %v56
    %v127 = vunpack.c.l.b16 %v57
    %v128 = vunpack.c.h.b16 %v57
    %v129 = vunpack.c.l.b16 %v58
    %v130 = vunpack.c.h.b16 %v58
    %v131 = vunpack.c.l.b16 %v59
    %v132 = vunpack.c.h.b16 %v59
    %v133 = vunpack.c.l.b16 %v60
    %v134 = vunpack.c.h.b16 %v60
    %v135 = vunpack.c.l.b16 %v61
    %v136 = vunpack.c.h.b16 %v61
    %v137 = vunpack.c.l.b16 %v62
    %v138 = vunpack.c.h.b16 %v62
    %v139 = vunpack.c.l.b16 %v63
    %v140 = vunpack.c.h.b16 %v63
    %v141 = vunpack.c.l.b16 %v64
    %v142 = vunpack.c.h.b16 %v64
    %v143 = vunpack.c.l.b16 %v65
    %v144 = vunpack.c.h.b16 %v65
    %v145 = vunpack.c.l.b16 %v66
    %v146 = vunpack.c.h.b16 %v66
    %v147 = vpack.c.b16 %v117, %v115
    %v148 = vpack.c.b16 %v118, %v116
    %v149 = vpack.c.b16 %v121, %v119
    %v150 = vpack.c.b16 %v122, %v120
    %v151 = vpack.c.b16 %v125, %v123
    %v152 = vpack.c.b16 %v126, %v124
    %v153 = vpack.c.b16 %v129, %v127
    %v154 = vpack.c.b16 %v130, %v128
    %v155 = vpack.c.b16 %v133, %v131
    %v156 = vpack.c.b16 %v134, %v132
    %v157 = vpack.c.b16 %v137, %v135
    %v158 = vpack.c.b16 %v138, %v136
    %v159 = vpack.c.b16 %v141, %v139
    %v160 = vpack.c.b16 %v142, %v140
    %v161 = vpack.c.b16 %v145, %v143
    %v162 = vpack.c.b16 %v146, %v144
    %v211 = vunpack.c.l.b16 %v67
    %v212 = vunpack.c.l.b16 %v68
    %v213 = vunpack.c.l.b16 %v69
    %v214 = vunpack.c.l.b16 %v70
    %v215 = vunpack.c.l.b16 %v71
    %v216 = vunpack.c.l.b16 %v72
    %v217 = vunpack.c.l.b16 %v73
    %v218 = vunpack.c.l.b16 %v74
    %v219 = vunpack.c.l.b16 %v75
    %v220 = vunpack.c.l.b16 %v76
    %v221 = vunpack.c.l.b16 %v77
    %v222 = vunpack.c.l.b16 %v78
    %v223 = vunpack.c.l.b16 %v79
    %v224 = vunpack.c.l.b16 %v80
    %v225 = vunpack.c.l.b16 %v81
    %v226 = vunpack.c.l.b16 %v82
    %v227 = vunpack.c.l.b16 %v83
    %v228 = vunpack.c.l.b16 %v84
    %v229 = vunpack.c.l.b16 %v85
    %v230 = vunpack.c.l.b16 %v86
    %v231 = vunpack.c.l.b16 %v87
    %v232 = vunpack.c.l.b16 %v88
    %v233 = vunpack.c.l.b16 %v89
    %v234 = vunpack.c.l.b16 %v90
    %v235 = vunpack.c.l.b16 %v91
    %v236 = vunpack.c.l.b16 %v92
    %v237 = vunpack.c.l.b16 %v93
    %v238 = vunpack.c.l.b16 %v94
    %v239 = vunpack.c.l.b16 %v95
    %v240 = vunpack.c.l.b16 %v96
    %v241 = vunpack.c.l.b16 %v97
    %v242 = vunpack.c.l.b16 %v98
    %v243 = vpack.c.b16 %v212, %v211
    %v244 = vpack.c.b16 %v214, %v213
    %v245 = vpack.c.b16 %v216, %v215
    %v246 = vpack.c.b16 %v218, %v217
    %v247 = vpack.c.b16 %v220, %v219
    %v248 = vpack.c.b16 %v222, %v221
    %v249 = vpack.c.b16 %v224, %v223
    %v250 = vpack.c.b16 %v226, %v225
    %v251 = vpack.c.b16 %v228, %v227
    %v252 = vpack.c.b16 %v230, %v229
    %v253 = vpack.c.b16 %v232, %v231
    %v254 = vpack.c.b16 %v234, %v233
    %v255 = vpack.c.b16 %v236, %v235
    %v256 = vpack.c.b16 %v238, %v237
    %v257 = vpack.c.b16 %v240, %v239
    %v258 = vpack.c.b16 %v242, %v241
    %275 = vmatpush.bf16.msra.mxu0 %v250
    %276 = vmatpush.bf16.msra.mxu0 %v249
    %277 = vmatpush.bf16.msra.mxu0 %v248
    %278 = vmatpush.bf16.msra.mxu0 %v247
    %279 = vmatpush.bf16.msra.mxu0 %v246
    %280 = vmatpush.bf16.msra.mxu0 %v245
    %281 = vmatpush.bf16.msra.mxu0 %v244
    %282 = vmatpush.bf16.msra.mxu0 %v243
    %283 = vmatmul.bf16.gmra.mxu0 %v147
    %v284 = vpop.f32.mrf.mxu0
    %v285 = vadd.f32 0.0, %v284
    %v286 = vpop.f32.mrf.mxu0
    %v287 = vadd.f32 0.0, %v286
    %288 = vmatmul.bf16.gmra.mxu0 %v149
    %v289 = vpop.f32.mrf.mxu0
    %v290 = vadd.f32 0.0, %v289
    %v291 = vpop.f32.mrf.mxu0
    %v292 = vadd.f32 0.0, %v291
    %293 = vmatmul.bf16.gmra.mxu0 %v151
    %v294 = vpop.f32.mrf.mxu0
    %v295 = vadd.f32 0.0, %v294
    %v296 = vpop.f32.mrf.mxu0
    %v297 = vadd.f32 0.0, %v296
    %298 = vmatmul.bf16.gmra.mxu0 %v153
    %v299 = vpop.f32.mrf.mxu0
    %v300 = vadd.f32 0.0, %v299
    %v301 = vpop.f32.mrf.mxu0
    %v302 = vadd.f32 0.0, %v301
    %303 = vmatmul.bf16.gmra.mxu0 %v155
    %v304 = vpop.f32.mrf.mxu0
    %v305 = vadd.f32 0.0, %v304
    %v306 = vpop.f32.mrf.mxu0
    %v307 = vadd.f32 0.0, %v306
    %308 = vmatmul.bf16.gmra.mxu0 %v157
    %v309 = vpop.f32.mrf.mxu0
    %v310 = vadd.f32 0.0, %v309
    %v311 = vpop.f32.mrf.mxu0
    %v312 = vadd.f32 0.0, %v311
    %313 = vmatmul.bf16.gmra.mxu0 %v159
    %v314 = vpop.f32.mrf.mxu0
    %v315 = vadd.f32 0.0, %v314
    %v316 = vpop.f32.mrf.mxu0
    %v317 = vadd.f32 0.0, %v316
    %318 = vmatmul.bf16.gmra.mxu0 %v161
    %v319 = vpop.f32.mrf.mxu0
    %v320 = vadd.f32 0.0, %v319
    %v321 = vpop.f32.mrf.mxu0
    %v322 = vadd.f32 0.0, %v321
    %323 = vdwg.mxu0
    %324 = vmatpush.bf16.msra.mxu0 %v258
    %325 = vmatpush.bf16.msra.mxu0 %v257
    %326 = vmatpush.bf16.msra.mxu0 %v256
    %327 = vmatpush.bf16.msra.mxu0 %v255
    %328 = vmatpush.bf16.msra.mxu0 %v254
    %329 = vmatpush.bf16.msra.mxu0 %v253
    %330 = vmatpush.bf16.msra.mxu0 %v252
    %331 = vmatpush.bf16.msra.mxu0 %v251
    %332 = vmatmul.bf16.gmra.mxu0 %v148
    %v333 = vpop.f32.mrf.mxu0
    %v334 = vadd.f32 %v285, %v333
    %v335 = vpop.f32.mrf.mxu0
    %v336 = vadd.f32 %v287, %v335
    %337 = vmatmul.bf16.gmra.mxu0 %v150
    %v338 = vpop.f32.mrf.mxu0
    %v339 = vadd.f32 %v290, %v338
    %v340 = vpop.f32.mrf.mxu0
    %v341 = vadd.f32 %v292, %v340
    %342 = vmatmul.bf16.gmra.mxu0 %v152
    %v343 = vpop.f32.mrf.mxu0
    %v344 = vadd.f32 %v295, %v343
    %v345 = vpop.f32.mrf.mxu0
    %v346 = vadd.f32 %v297, %v345
    %347 = vmatmul.bf16.gmra.mxu0 %v154
    %v348 = vpop.f32.mrf.mxu0
    %v349 = vadd.f32 %v300, %v348
    %v350 = vpop.f32.mrf.mxu0
    %v351 = vadd.f32 %v302, %v350
    %352 = vmatmul.bf16.gmra.mxu0 %v156
    %v353 = vpop.f32.mrf.mxu0
    %v354 = vadd.f32 %v305, %v353
    %v355 = vpop.f32.mrf.mxu0
    %v356 = vadd.f32 %v307, %v355
    %357 = vmatmul.bf16.gmra.mxu0 %v158
    %v358 = vpop.f32.mrf.mxu0
    %v359 = vadd.f32 %v310, %v358
    %v360 = vpop.f32.mrf.mxu0
    %v361 = vadd.f32 %v312, %v360
    %362 = vmatmul.bf16.gmra.mxu0 %v160
    %v363 = vpop.f32.mrf.mxu0
    %v364 = vadd.f32 %v315, %v363
    %v365 = vpop.f32.mrf.mxu0
    %v366 = vadd.f32 %v317, %v365
    %367 = vmatmul.bf16.gmra.mxu0 %v162
    %v368 = vpop.f32.mrf.mxu0
    %v369 = vadd.f32 %v320, %v368
    %v370 = vpop.f32.mrf.mxu0
    %v371 = vadd.f32 %v322, %v370
    %372 = vdwg.mxu0
    %v373 = vadd.f32 %v35, %v334
    %v374 = vadd.f32 %v36, %v336
    %v375 = vadd.f32 %v37, %v339
    %v376 = vadd.f32 %v38, %v341
    %v377 = vadd.f32 %v39, %v344
    %v378 = vadd.f32 %v40, %v346
    %v379 = vadd.f32 %v41, %v349
    %v380 = vadd.f32 %v42, %v351
    %v381 = vadd.f32 %v43, %v354
    %v382 = vadd.f32 %v44, %v356
    %v383 = vadd.f32 %v45, %v359
    %v384 = vadd.f32 %v46, %v361
    %v385 = vadd.f32 %v47, %v364
    %v386 = vadd.f32 %v48, %v366
    %v387 = vadd.f32 %v49, %v369
    %v388 = vadd.f32 %v50, %v371
    %389 = vst [vmem:[#allocation2] sm:$0xff] %v373
    %390 = vst [vmem:[#allocation2 + $0x8] sm:$0xff] %v374
    %391 = vst [vmem:[#allocation2 + $0x10] sm:$0xff] %v375
    %392 = vst [vmem:[#allocation2 + $0x18] sm:$0xff] %v376
    %393 = vst [vmem:[#allocation2 + $0x20] sm:$0xff] %v377
    %394 = vst [vmem:[#allocation2 + $0x28] sm:$0xff] %v378
    %395 = vst [vmem:[#allocation2 + $0x30] sm:$0xff] %v379
    %396 = vst [vmem:[#allocation2 + $0x38] sm:$0xff] %v380
    %397 = vst [vmem:[#allocation2 + $0x40] sm:$0xff] %v381
    %398 = vst [vmem:[#allocation2 + $0x48] sm:$0xff] %v382
    %399 = vst [vmem:[#allocation2 + $0x50] sm:$0xff] %v383
    %400 = vst [vmem:[#allocation2 + $0x58] sm:$0xff] %v384
    %401 = vst [vmem:[#allocation2 + $0x60] sm:$0xff] %v385
    %402 = vst [vmem:[#allocation2 + $0x68] sm:$0xff] %v386
    %403 = vst [vmem:[#allocation2 + $0x70] sm:$0xff] %v387
    %404 = vst [vmem:[#allocation2 + $0x78] sm:$0xff] %v388
    // Predicated region
    $region18: #{_conv_im2col.1} parent=1 // pred_check
      %p405 = pneg %p15
    $region19: #{_conv_im2col.1} parent=1 // pred_check_branch
      %407 = sbr.rel (%p405) target = $region21
    $region20: #{_conv_im2col.1} parent=1 // pred_region
      %v408 = vld [vmem:[#allocation2] sm:$0xff]
      %v409 = vld [vmem:[#allocation2 + $0x8] sm:$0xff]
      %v410 = vld [vmem:[#allocation2 + $0x10] sm:$0xff]
      %v411 = vld [vmem:[#allocation2 + $0x18] sm:$0xff]
      %v412 = vld [vmem:[#allocation2 + $0x20] sm:$0xff]
      %v413 = vld [vmem:[#allocation2 + $0x28] sm:$0xff]
      %v414 = vld [vmem:[#allocation2 + $0x30] sm:$0xff]
      %v415 = vld [vmem:[#allocation2 + $0x38] sm:$0xff]
      %v416 = vld [vmem:[#allocation2 + $0x40] sm:$0xff]
      %v417 = vld [vmem:[#allocation2 + $0x48] sm:$0xff]
      %v418 = vld [vmem:[#allocation2 + $0x50] sm:$0xff]
      %v419 = vld [vmem:[#allocation2 + $0x58] sm:$0xff]
      %v420 = vld [vmem:[#allocation2 + $0x60] sm:$0xff]
      %v421 = vld [vmem:[#allocation2 + $0x68] sm:$0xff]
      %v422 = vld [vmem:[#allocation2 + $0x70] sm:$0xff]
      %v423 = vld [vmem:[#allocation2 + $0x78] sm:$0xff]
      %v424 = vld [vmem:[%s2] sm:$0x1]
      %v426 = vperm.slane %v424, 0
      %v428 = vadd.f32 %v408, %v426
      %v429 = vadd.f32 %v409, %v426
      %v430 = vadd.f32 %v410, %v426
      %v431 = vadd.f32 %v411, %v426
      %v432 = vadd.f32 %v412, %v426
      %v433 = vadd.f32 %v413, %v426
      %v434 = vadd.f32 %v414, %v426
      %v435 = vadd.f32 %v415, %v426
      %v436 = vadd.f32 %v416, %v426
      %v437 = vadd.f32 %v417, %v426
      %v438 = vadd.f32 %v418, %v426
      %v439 = vadd.f32 %v419, %v426
      %v440 = vadd.f32 %v420, %v426
      %v441 = vadd.f32 %v421, %v426
      %v442 = vadd.f32 %v422, %v426
      %v443 = vadd.f32 %v423, %v426
      %v444 = vmax.f32 %v428, 0.0
      %v445 = vmax.f32 %v429, 0.0
      %v446 = vmax.f32 %v430, 0.0
      %v447 = vmax.f32 %v431, 0.0
      %v448 = vmax.f32 %v432, 0.0
      %v449 = vmax.f32 %v433, 0.0
      %v450 = vmax.f32 %v434, 0.0
      %v451 = vmax.f32 %v435, 0.0
      %v452 = vmax.f32 %v436, 0.0
      %v453 = vmax.f32 %v437, 0.0
      %v454 = vmax.f32 %v438, 0.0
      %v455 = vmax.f32 %v439, 0.0
      %v456 = vmax.f32 %v440, 0.0
      %v457 = vmax.f32 %v441, 0.0
      %v458 = vmax.f32 %v442, 0.0
      %v459 = vmax.f32 %v443, 0.0
      %v460 = vpack.c.bf16 %v444, %v444
      %v461 = vpack.c.bf16 %v445, %v445
      %v462 = vpack.c.bf16 %v446, %v446
      %v463 = vpack.c.bf16 %v447, %v447
      %v464 = vpack.c.bf16 %v448, %v448
      %v465 = vpack.c.bf16 %v449, %v449
      %v466 = vpack.c.bf16 %v450, %v450
      %v467 = vpack.c.bf16 %v451, %v451
      %v468 = vpack.c.bf16 %v452, %v452
      %v469 = vpack.c.bf16 %v453, %v453
      %v470 = vpack.c.bf16 %v454, %v454
      %v471 = vpack.c.bf16 %v455, %v455
      %v472 = vpack.c.bf16 %v456, %v456
      %v473 = vpack.c.bf16 %v457, %v457
      %v474 = vpack.c.bf16 %v458, %v458
      %v475 = vpack.c.bf16 %v459, %v459
      %476 = vst [vmem:[#allocation3] sm:$0xf] %v460
      %477 = vst [vmem:[#allocation3 + $0x4] sm:$0xf] %v461
      %478 = vst [vmem:[#allocation3 + $0x8] sm:$0xf] %v462
      %479 = vst [vmem:[#allocation3 + $0xc] sm:$0xf] %v463
      %480 = vst [vmem:[#allocation3 + $0x10] sm:$0xf] %v464
      %481 = vst [vmem:[#allocation3 + $0x14] sm:$0xf] %v465
      %482 = vst [vmem:[#allocation3 + $0x18] sm:$0xf] %v466
      %483 = vst [vmem:[#allocation3 + $0x1c] sm:$0xf] %v467
      %484 = vst [vmem:[#allocation3 + $0x20] sm:$0xf] %v468
      %485 = vst [vmem:[#allocation3 + $0x24] sm:$0xf] %v469
      %486 = vst [vmem:[#allocation3 + $0x28] sm:$0xf] %v470
      %487 = vst [vmem:[#allocation3 + $0x2c] sm:$0xf] %v471
      %488 = vst [vmem:[#allocation3 + $0x30] sm:$0xf] %v472
      %489 = vst [vmem:[#allocation3 + $0x34] sm:$0xf] %v473
      %490 = vst [vmem:[#allocation3 + $0x38] sm:$0xf] %v474
      %491 = vst [vmem:[#allocation3 + $0x3c] sm:$0xf] %v475
    $region21: #{_conv_im2col.1} parent=1 // pred_fallthru
      _
    // Predicated region
    $region22: #{_conv_im2col.1} parent=1 // pred_check
      _
    $region23: #{_conv_im2col.1} parent=1 // pred_check_branch
      %493 = sbr.rel (0) target = $region25
    $region24: #{_conv_im2col.1} parent=1 // pred_region
      %495 = vsyncadd [#allocation4], 0
      %s496 = sshll.u32 [#allocation3], 4
      %s497 = int_to_ptr.vmem [resolvable:$true] %s496
      %s498 = sshll.u32 %s3, 4
      %s499 = int_to_ptr.hbm [resolvable:$true] %s498
      %504 = dma.vmem_to_hbm [thread:$0]  %s497, 1024, %s499, [#allocation4], 64, 64, 4
    $region25: #{_conv_im2col.1} parent=1 // pred_fallthru
      _
    // Predicated region
    $region26: #{_conv_im2col.1} parent=1 // pred_check
      _
    $region27: #{_conv_im2col.1} parent=1 // pred_check_branch
      %506 = sbr.rel (0) target = $region29
    $region28: #{_conv_im2col.1} parent=1 // pred_region
      %508 = dma.done [#allocation4], 1024
    $region29: #{_conv_im2col.1} parent=1 // pred_fallthru
      _
    %509 = vsyncpa [#allocation4], 1

</llo_original>
